<compile_context>
chip_gen: v7x
topology: tpu7x:2x2x1
jax: 0.10.0
libtpu: 0.0.40
codegen_flags: <defaults>
</compile_context>

<pallas_src>
import jax
import jax.numpy as jnp
from jax.experimental import pallas as pl
from jax.experimental.pallas import tpu as pltpu


def fm_kernel(x_ref, r_ref, s_ref, b_ref, o_ref):
    """One (TB, n) batch tile.

    x_ref: (TB, n)   f32  streamed batch tile
    r_ref: (n, k+1)  f32  columns [0:k] = v, column [k] = Linear weight (transposed)
    s_ref: (n, 1)    f32  -0.5 * sum_k v[:, k]^2   (fused p2 row-sum column)
    b_ref: (1, 1)    f32  Linear bias, in SMEM
    o_ref: (TB, 1)   f32
    """
    x = x_ref[...]
    k = r_ref.shape[1] - 1

    # Fused MXU pass: p[:, :k] = x @ v  (interaction part 1),
    #                 p[:,  k] = x @ w  (linear part, no bias).
    p = jnp.dot(x, r_ref[...], preferred_element_type=jnp.float32)

    # Second MXU pass, single fused column:
    #   q = (x^2) @ (-0.5 * rowsum(v^2)) = -0.5 * ((x^2) @ (v^2)).sum(axis=1)
    q = jnp.dot(x * x, s_ref[...], preferred_element_type=jnp.float32)

    p1 = p[:, :k]
    lin = p[:, k:k + 1]
    inter1 = 0.5 * jnp.sum(p1 * p1, axis=1, keepdims=True)   # (TB, 1)

    o_ref[...] = lin + q + inter1 + b_ref[0, 0]


def _pick_block_b(batch, n):
    """Largest batch tile (multiple of 8, <= 1024) whose double-buffered x tile
    stays within a conservative ~8 MiB slice of scoped VMEM — safe on v5e/v6e
    (128 MiB) and v7x (64 MiB physical / 32 MiB default scoped)."""
    budget = 8 * 1024 * 1024
    tb = budget // (2 * max(n, 1) * 4)
    tb = max(8, min(1024, (tb // 8) * 8))
    b_pad8 = ((batch + 7) // 8) * 8
    return min(tb, b_pad8)


def fm_forward(x, w_t, bias, v, *, block_b=None):
    """x: (B, n); w_t: (n, 1) transposed Linear weight; bias: (1,); v: (n, k).

    Returns (B,) float32, matching FM.forward(x) (after .squeeze()).
    """
    x = x.astype(jnp.float32)
    batch, n = x.shape
    k = v.shape[1]

    # ---- weight-side precompute (static per model: do once, not per tile) ----
    r = jnp.concatenate([v.astype(jnp.float32), w_t.astype(jnp.float32)],
                        axis=1)                                           # (n, k+1)
    s = -0.5 * jnp.sum(v.astype(jnp.float32) ** 2, axis=1, keepdims=True)  # (n, 1)
    b2 = jnp.reshape(bias, (1, 1)).astype(jnp.float32)                     # (1, 1)

    tb = block_b if block_b is not None else _pick_block_b(batch, n)
    tb = max(8, (tb // 8) * 8)
    num_tiles = pl.cdiv(batch, tb)
    b_pad = num_tiles * tb
    if b_pad != batch:
        x = jnp.pad(x, ((0, b_pad - batch), (0, 0)))

    # TODO(synk): for very large n, add a reduction grid axis over n with VMEM
    # scratch accumulators (square p1 only in the finalize branch).
    out = pl.pallas_call(
        fm_kernel,
        out_shape=jax.ShapeDtypeStruct((b_pad, 1), jnp.float32),
        grid=(num_tiles,),
        in_specs=[
            pl.BlockSpec((tb, n), lambda i: (i, 0)),            # streamed x tiles
            pl.BlockSpec((n, k + 1), lambda i: (0, 0)),          # VMEM-resident [v | w]
            pl.BlockSpec((n, 1), lambda i: (0, 0)),              # VMEM-resident fused v^2 rowsum
            pl.BlockSpec(memory_space=pltpu.MemorySpace.SMEM),   # scalar bias
        ],
        out_specs=pl.BlockSpec((tb, 1), lambda i: (i, 0)),
        compiler_params=pltpu.CompilerParams(
            dimension_semantics=("parallel",),
        ),
    )(x, r, s, b2)

    return out[:batch, 0]


def fm_reference(x, w_t, bias, v):
    linear = (x @ w_t)[:, 0] + bias[0]
    p1 = x @ v
    p2 = (x ** 2) @ (v ** 2)
    return linear + 0.5 * jnp.sum(p1 ** 2 - p2, axis=1)


if __name__ == "__main__":
    # Small shapes consistent with the module: B samples, n features, k factors.
    B, n, k = 512, 32, 16

    key = jax.random.PRNGKey(0)
    kx, kw, kb, kv = jax.random.split(key, 4)

    x = jax.random.normal(kx, (B, n), dtype=jnp.float32)
    # nn.Linear(n, 1): weight (1, n), bias (1,).  Stored transposed as (n, 1).
    w_t = jax.random.normal(kw, (n, 1), dtype=jnp.float32) * 0.1
    bias = jax.random.normal(kb, (1,), dtype=jnp.float32) * 0.1
    # self.v = nn.Parameter(torch.randn(n, k))  (scaled for a well-conditioned demo)
    v = jax.random.normal(kv, (n, k), dtype=jnp.float32) * 0.1

    # block_b=128 -> 4 pipelined grid steps over the batch for this small demo.
    y = fm_forward(x, w_t, bias, v, block_b=128)
    y = jax.block_until_ready(y)

    y_ref = fm_reference(x, w_t, bias, v)
    assert y.shape == (B,)
    assert jnp.allclose(y, y_ref, rtol=1e-4, atol=1e-4), (
        float(jnp.max(jnp.abs(y - y_ref))))

    print("KERNEL_OK")
</pallas_src>

<mosaic_0001>
module attributes {stable_mosaic.version = 11 : i64} {
  func.func @fm_kernel(%arg0: i32, %arg1: memref<128x32xf32, #tpu.memory_space<vmem>>, %arg2: memref<32x17xf32, #tpu.memory_space<vmem>>, %arg3: memref<32x1xf32, #tpu.memory_space<vmem>>, %arg4: memref<1x1xf32, #tpu.memory_space<smem>>, %arg5: memref<128x1xf32, #tpu.memory_space<vmem>>) attributes {dimension_semantics = [#tpu.dimension_semantics<parallel>], iteration_bounds = array<i64: 4>, scalar_prefetch = 0 : i64, scratch_operands = 0 : i64, tpu.core_type = #tpu.core_type<tc>, window_params = [{transform_indices = @transform_0, window_bounds = array<i64: 128, 32>}, {pipeline_mode = #tpu.pipeline_mode<synchronous>, transform_indices = @transform_1, window_bounds = array<i64: 32, 17>}, {pipeline_mode = #tpu.pipeline_mode<synchronous>, transform_indices = @transform_2, window_bounds = array<i64: 32, 1>}, {transform_indices = @transform_3, window_bounds = array<i64: 1, 1>}, {transform_indices = @transform_4, window_bounds = array<i64: 128, 1>}]} {
    %c0 = arith.constant 0 : index
    %c0_0 = arith.constant 0 : index
    %0 = vector.load %arg1[%c0, %c0_0] : memref<128x32xf32, #tpu.memory_space<vmem>>, vector<128x32xf32>
    %c0_1 = arith.constant 0 : index
    %c0_2 = arith.constant 0 : index
    %1 = vector.load %arg2[%c0_1, %c0_2] : memref<32x17xf32, #tpu.memory_space<vmem>>, vector<32x17xf32>
    %cst = arith.constant dense<0.000000e+00> : vector<128x17xf32>
    %2 = tpu.matmul %0, %1, %cst {dimension_numbers = #tpu.dot_dimension_numbers<[1], [0], [0], [1], [0, 0, 1, 1], [], []>} : vector<128x32xf32>, vector<32x17xf32>, vector<128x17xf32> -> vector<128x17xf32>
    %3 = arith.mulf %0, %0 : vector<128x32xf32>
    %c0_3 = arith.constant 0 : index
    %c0_4 = arith.constant 0 : index
    %4 = vector.load %arg3[%c0_3, %c0_4] : memref<32x1xf32, #tpu.memory_space<vmem>>, vector<32x1xf32>
    %cst_5 = arith.constant dense<0.000000e+00> : vector<128x1xf32>
    %5 = tpu.matmul %3, %4, %cst_5 {dimension_numbers = #tpu.dot_dimension_numbers<[1], [0], [0], [1], [0, 0, 1, 1], [], []>} : vector<128x32xf32>, vector<32x1xf32>, vector<128x1xf32> -> vector<128x1xf32>
    %6 = vector.extract_strided_slice %2 {offsets = [0, 0], sizes = [128, 16], strides = [1, 1]} : vector<128x17xf32> to vector<128x16xf32>
    %7 = vector.extract_strided_slice %2 {offsets = [0, 16], sizes = [128, 1], strides = [1, 1]} : vector<128x17xf32> to vector<128x1xf32>
    %8 = arith.mulf %6, %6 : vector<128x16xf32>
    %cst_6 = arith.constant dense<0.000000e+00> : vector<128xf32>
    %9 = vector.multi_reduction <add>, %8, %cst_6 [1] : vector<128x16xf32> to vector<128xf32>
    %10 = vector.shape_cast %9 : vector<128xf32> to vector<128x1xf32>
    %cst_7 = arith.constant 5.000000e-01 : f32
    %11 = vector.broadcast %cst_7 : f32 to vector<128x1xf32>
    %12 = arith.mulf %11, %10 : vector<128x1xf32>
    %13 = arith.addf %7, %5 : vector<128x1xf32>
    %14 = arith.addf %13, %12 : vector<128x1xf32>
    %c0_8 = arith.constant 0 : index
    %c0_9 = arith.constant 0 : index
    %15 = memref.load %arg4[%c0_8, %c0_9] : memref<1x1xf32, #tpu.memory_space<smem>>
    %16 = vector.broadcast %15 : f32 to vector<128x1xf32>
    %17 = arith.addf %14, %16 : vector<128x1xf32>
    %c0_10 = arith.constant 0 : index
    %c0_11 = arith.constant 0 : index
    %18 = vector.load %arg5[%c0_10, %c0_11] : memref<128x1xf32, #tpu.memory_space<vmem>>, vector<128x1xf32>
    tpu.vector_store %arg5[%c0_10, %c0_11], %17 {strides = array<i32>} : memref<128x1xf32, #tpu.memory_space<vmem>>, vector<128x1xf32>,
    return
  }
  func.func @transform_0(%arg0: i32) -> (i32, i32) {
    %c0_i32 = arith.constant 0 : i32
    %c0_i32_0 = arith.constant 0 : i32
    return %arg0, %c0_i32 : i32, i32
  }
  func.func @transform_1(%arg0: i32) -> (i32, i32) {
    %c0_i32 = arith.constant 0 : i32
    %c0_i32_0 = arith.constant 0 : i32
    %c0_i32_1 = arith.constant 0 : i32
    return %c0_i32, %c0_i32_0 : i32, i32
  }
  func.func @transform_2(%arg0: i32) -> (i32, i32) {
    %c0_i32 = arith.constant 0 : i32
    %c0_i32_0 = arith.constant 0 : i32
    %c0_i32_1 = arith.constant 0 : i32
    return %c0_i32, %c0_i32_0 : i32, i32
  }
  func.func @transform_3(%arg0: i32) -> (i32, i32) {
    %c0_i32 = arith.constant 0 : i32
    %c0_i32_0 = arith.constant 0 : i32
    %c0_i32_1 = arith.constant 0 : i32
    return %c0_i32, %c0_i32_0 : i32, i32
  }
  func.func @transform_4(%arg0: i32) -> (i32, i32) {
    %c0_i32 = arith.constant 0 : i32
    %c0_i32_0 = arith.constant 0 : i32
    return %arg0, %c0_i32 : i32, i32
  }
}

</mosaic_0001>

<llo_original>
// kernel: tpu_custom_call.1
$region0: #{tpu_custom_call.1}
  #allocation0 [shape = 'u32[]', space=smem, size = 0x4, offset = 0x4, fixed_abs, tag = 'smem constant byte address 0x4 - core index']
  #allocation1 [shape = 'u32[144,128]{1,0:T(1,128)}', space=vmem, size = 0x12000, scoped, tag = 'internal scratch']
  #allocation2 [shape = 'f32[1,1]{1,0:T(1,128)S(6)}', space=smem, size = 0x200, scoped, tag = 'scoped memory for tpu_custom_call.1']
  %s0 = inlined_call_operand.vmem [shape: f32[512,32], index: 0, kind: input, shape index: {}]
  %s1 = inlined_call_operand.vmem [shape: f32[32,17], index: 1, kind: input, shape index: {}]
  %s2 = inlined_call_operand.vmem [shape: f32[32,1], index: 2, kind: input, shape index: {}]
  %s3 = inlined_call_operand.<no memory space> [shape: f32[1,1], index: 3, kind: input, shape index: {}]
  %s4 = inlined_call_operand.vmem [shape: f32[512,1], index: 4, kind: output, shape index: {}]
  %s5 = sld [smem:[#allocation0]]
  $region49: #{tpu_custom_call.1} parent=0
    _
  %s7 = ssub.s32 1, %s5
  %s8 = scalar_select 0, %s7, %s5
  %9 = sst [smem:[#allocation2]] %s3
  loop: start=0, step=1, limit=6
  $region2: #{tpu_custom_call.1} parent=0 // loop_pre_header
    _
  $region3: #{tpu_custom_call.1} parent=0 // loop_header
    %s11 = sphi 0, %s15
    %p12 = scmp.ge.s32.totalorder %s11, 6
    %s21 = sphi 0, %s23
    %s24 = sphi 0, %s21
    %s25 = sphi 0, %s24
    %s41 = sphi 0, %s25
    %s45 = sphi 0, %s45
    %s47 = sphi 0, %s45
    %s48 = sphi 0, %s47
    %s62 = sphi 0, %s48
    %s66 = sphi 0, %s66
    %s68 = sphi 0, %s66
    %s69 = sphi 0, %s68
    %s83 = sphi 0, %s69
    %s87 = sphi 0, %s87
    %s89 = sphi 0, %s87
    %s90 = sphi 0, %s89
    %s104 = sphi 0, %s90
    %s110 = sphi 0, %s112
    %s113 = sphi 0, %s110
    %s114 = sphi 0, %s113
    %s130 = sphi 0, %s114
  $region4: #{tpu_custom_call.1} parent=0 // loop_header_branch
    %14 = sbr.rel (%p12) target = $region8
  $region5: #{tpu_custom_call.1} parent=0 // loop_body
    %s16 = ssub.s32 %s11, 1
    %s17 = ssub.s32 %s11, 2
    %s18 = sadd.s32 %s11, 1
    %s19 = ssub.s32 %s11, %s18
    %p20 = scmp.eq.s32.totalorder %s19, 0
    %s22 = sadd.s32 %s21, 1
    %s23 = scalar_select %p20, %s21, %s22
    %p26 = pneg %p20
    %p27 = scmp.eq.s32.totalorder %s11, 3
    %p28 = por %p26, %p27
    %p29 = scmp.ne.s32.totalorder %s21, %s24
    %p30 = scmp.eq.s32.totalorder %s11, 0
    %p31 = por %p29, %p30
    %p32 = scmp.ne.s32.totalorder %s21, %s24
    %p33 = scmp.eq.s32.totalorder %s16, 3
    %p34 = por %p32, %p33
    %p35 = scmp.ne.s32.totalorder %s24, %s25
    %p36 = scmp.eq.s32.totalorder %s16, 0
    %p37 = por %p35, %p36
    %p38 = scmp.ne.s32.totalorder %s24, %s25
    %p39 = scmp.eq.s32.totalorder %s17, 3
    %p40 = por %p38, %p39
    %p42 = scmp.ne.s32.totalorder %s25, %s41
    %p43 = scmp.eq.s32.totalorder %s17, 0
    %p44 = por %p42, %p43
    %s46 = sadd.s32 %s45, 1
    %p49 = scmp.eq.s32.totalorder %s11, 3
    %p50 = scmp.ne.s32.totalorder %s45, %s47
    %p51 = scmp.eq.s32.totalorder %s11, 0
    %p52 = por %p50, %p51
    %p53 = scmp.ne.s32.totalorder %s45, %s47
    %p54 = scmp.eq.s32.totalorder %s16, 3
    %p55 = por %p53, %p54
    %p56 = scmp.ne.s32.totalorder %s47, %s48
    %p57 = scmp.eq.s32.totalorder %s16, 0
    %p58 = por %p56, %p57
    %p59 = scmp.ne.s32.totalorder %s47, %s48
    %p60 = scmp.eq.s32.totalorder %s17, 3
    %p61 = por %p59, %p60
    %p63 = scmp.ne.s32.totalorder %s48, %s62
    %p64 = scmp.eq.s32.totalorder %s17, 0
    %p65 = por %p63, %p64
    %s67 = sadd.s32 %s66, 1
    %p70 = scmp.eq.s32.totalorder %s11, 3
    %p71 = scmp.ne.s32.totalorder %s66, %s68
    %p72 = scmp.eq.s32.totalorder %s11, 0
    %p73 = por %p71, %p72
    %p74 = scmp.ne.s32.totalorder %s66, %s68
    %p75 = scmp.eq.s32.totalorder %s16, 3
    %p76 = por %p74, %p75
    %p77 = scmp.ne.s32.totalorder %s68, %s69
    %p78 = scmp.eq.s32.totalorder %s16, 0
    %p79 = por %p77, %p78
    %p80 = scmp.ne.s32.totalorder %s68, %s69
    %p81 = scmp.eq.s32.totalorder %s17, 3
    %p82 = por %p80, %p81
    %p84 = scmp.ne.s32.totalorder %s69, %s83
    %p85 = scmp.eq.s32.totalorder %s17, 0
    %p86 = por %p84, %p85
    %s88 = sadd.s32 %s87, 1
    %p91 = scmp.eq.s32.totalorder %s11, 3
    %p92 = scmp.ne.s32.totalorder %s87, %s89
    %p93 = scmp.eq.s32.totalorder %s11, 0
    %p94 = por %p92, %p93
    %p95 = scmp.ne.s32.totalorder %s87, %s89
    %p96 = scmp.eq.s32.totalorder %s16, 3
    %p97 = por %p95, %p96
    %p98 = scmp.ne.s32.totalorder %s89, %s90
    %p99 = scmp.eq.s32.totalorder %s16, 0
    %p100 = por %p98, %p99
    %p101 = scmp.ne.s32.totalorder %s89, %s90
    %p102 = scmp.eq.s32.totalorder %s17, 3
    %p103 = por %p101, %p102
    %p105 = scmp.ne.s32.totalorder %s90, %s104
    %p106 = scmp.eq.s32.totalorder %s17, 0
    %p107 = por %p105, %p106
    %s108 = ssub.s32 %s11, %s18
    %p109 = scmp.eq.s32.totalorder %s108, 0
    %s111 = sadd.s32 %s110, 1
    %s112 = scalar_select %p109, %s110, %s111
    %p115 = pneg %p109
    %p116 = scmp.eq.s32.totalorder %s11, 3
    %p117 = por %p115, %p116
    %p118 = scmp.ne.s32.totalorder %s110, %s113
    %p119 = scmp.eq.s32.totalorder %s11, 0
    %p120 = por %p118, %p119
    %p121 = scmp.ne.s32.totalorder %s110, %s113
    %p122 = scmp.eq.s32.totalorder %s16, 3
    %p123 = por %p121, %p122
    %p124 = scmp.ne.s32.totalorder %s113, %s114
    %p125 = scmp.eq.s32.totalorder %s16, 0
    %p126 = por %p124, %p125
    %p127 = scmp.ne.s32.totalorder %s113, %s114
    %p128 = scmp.eq.s32.totalorder %s17, 3
    %p129 = por %p127, %p128
    %p131 = scmp.ne.s32.totalorder %s114, %s130
    %p132 = scmp.eq.s32.totalorder %s17, 0
    %p133 = por %p131, %p132
    %p134 = scmp.le.s32.totalorder 1, %s11
    %p135 = scmp.lt.s32.totalorder %s11, 5
    %p136 = pnand %p134, %p135
    %p137 = pneg %p136
    // Predicated region
    $region9: #{tpu_custom_call.1} parent=5 // pred_check
      _
    $region10: #{tpu_custom_call.1} parent=5 // pred_check_branch
      %139 = sbr.rel (%p136) target = $region12
    $region11: #{tpu_custom_call.1} parent=5 // pred_region
      %s140 = ssub.s32 %s11, 1
      // Predicated region
      $region13: #{tpu_custom_call.1} parent=11 // pred_check
        %p141 = pneg %p58
      $region14: #{tpu_custom_call.1} parent=11 // pred_check_branch
        %143 = sbr.rel (%p141) target = $region16
      $region15: #{tpu_custom_call.1} parent=11 // pred_region
        _
      $region16: #{tpu_custom_call.1} parent=11 // pred_fallthru
        _
      // Predicated region
      $region17: #{tpu_custom_call.1} parent=11 // pred_check
        %p144 = pneg %p79
      $region18: #{tpu_custom_call.1} parent=11 // pred_check_branch
        %146 = sbr.rel (%p144) target = $region20
      $region19: #{tpu_custom_call.1} parent=11 // pred_region
        _
      $region20: #{tpu_custom_call.1} parent=11 // pred_fallthru
        _
      // Predicated region
      $region21: #{tpu_custom_call.1} parent=11 // pred_check
        %p147 = pneg %p100
      $region22: #{tpu_custom_call.1} parent=11 // pred_check_branch
        %149 = sbr.rel (%p147) target = $region24
      $region23: #{tpu_custom_call.1} parent=11 // pred_region
        _
      $region24: #{tpu_custom_call.1} parent=11 // pred_fallthru
        _
    $region12: #{tpu_custom_call.1} parent=5 // pred_fallthru
      _
    %p150 = scmp.lt.s32.totalorder %s11, 4
    // Predicated region
    $region25: #{tpu_custom_call.1} parent=5 // pred_check
      %p151 = pneg %p150
    $region26: #{tpu_custom_call.1} parent=5 // pred_check_branch
      %153 = sbr.rel (%p151) target = $region28
    $region27: #{tpu_custom_call.1} parent=5 // pred_region
      // Predicated region
      $region29: #{tpu_custom_call.1} parent=27 // pred_check
        %p154 = pneg %p31
      $region30: #{tpu_custom_call.1} parent=27 // pred_check_branch
        %156 = sbr.rel (%p154) target = $region32
      $region31: #{tpu_custom_call.1} parent=27 // pred_region
        %s157 = smul.u32 16, %s11
        %p158 = scmp.lt.s32.totalorder %s157, 63
        %s159 = scalar_select %p158, %s157, 63
        %s160 = smul.addr %s159, 8
        %s161 = scalar_lea.vmem %s0, %s160
        %s162 = smul.u32 16, %s11
      $region32: #{tpu_custom_call.1} parent=27 // pred_fallthru
        _
    $region28: #{tpu_custom_call.1} parent=5 // pred_fallthru
      _
    %p163 = scmp.le.s32.totalorder 1, %s11
    %p164 = scmp.lt.s32.totalorder %s11, 5
    %p165 = pnand %p163, %p164
    %p166 = pneg %p165
    // Predicated region
    $region33: #{tpu_custom_call.1} parent=5 // pred_check
      _
    $region34: #{tpu_custom_call.1} parent=5 // pred_check_branch
      %168 = sbr.rel (%p165) target = $region36
    $region35: #{tpu_custom_call.1} parent=5 // pred_region
      %s169 = ssub.s32 %s11, 1
      %s170 = smul.u32 16, %s16
      %p171 = scmp.lt.s32.totalorder %s170, 63
      %s172 = scalar_select %p171, %s170, 63
      %s173 = smul.addr %s172, 8
      %s174 = scalar_lea.vmem %s0, %s173
      %p175 = pneg %p37
      %p176 = pneg %p34
      %p177 = pneg %p58
      %p178 = pneg %p55
      %p179 = pneg %p79
      %p180 = pneg %p76
      %p181 = pneg %p100
      %p182 = pneg %p97
      %p183 = pneg %p126
      %p184 = pneg %p123
      %s185 = smul.u32 16, %s16
      %p186 = scmp.lt.s32.totalorder %s185, 63
      %s187 = scalar_select %p186, %s185, 63
      %s188 = smul.addr %s187, 8
      %s189 = scalar_lea.vmem %s4, %s188
      %s190 = smul.u32 16, %s16
      %p191 = scmp.lt.s32.totalorder %s190, 63
      %s192 = scalar_select %p191, %s190, 63
      %s193 = smul.addr %s192, 8
      %s194 = scalar_lea.vmem %s0, %s193
      %s195 = smul.u32 16, %s16
      %s196 = smul.u32 16, %s16
      %p197 = scmp.lt.s32.totalorder %s196, 63
      %s198 = scalar_select %p197, %s196, 63
      %s199 = smul.addr %s198, 8
      %s200 = scalar_lea.vmem %s4, %s199
      %s201 = smul.u32 16, %s16
      %v202 = vld [vmem:[%s194] sm:$0xff]
      %v203 = vld [vmem:[%s194 + $0x8] sm:$0xff]
      %v204 = vld [vmem:[%s194 + $0x10] sm:$0xff]
      %v205 = vld [vmem:[%s194 + $0x18] sm:$0xff]
      %v206 = vld [vmem:[%s194 + $0x20] sm:$0xff]
      %v207 = vld [vmem:[%s194 + $0x28] sm:$0xff]
      %v208 = vld [vmem:[%s194 + $0x30] sm:$0xff]
      %v209 = vld [vmem:[%s194 + $0x38] sm:$0xff]
      %v210 = vld [vmem:[%s194 + $0x40] sm:$0xff]
      %v211 = vld [vmem:[%s194 + $0x48] sm:$0xff]
      %v212 = vld [vmem:[%s194 + $0x50] sm:$0xff]
      %v213 = vld [vmem:[%s194 + $0x58] sm:$0xff]
      %v214 = vld [vmem:[%s194 + $0x60] sm:$0xff]
      %v215 = vld [vmem:[%s194 + $0x68] sm:$0xff]
      %v216 = vld [vmem:[%s194 + $0x70] sm:$0xff]
      %v217 = vld [vmem:[%s194 + $0x78] sm:$0xff]
      %v218 = vld [vmem:[%s1] sm:$0xff]
      %v219 = vld [vmem:[%s1 + $0x8] sm:$0xff]
      %v220 = vld [vmem:[%s1 + $0x10] sm:$0xff]
      %v221 = vld [vmem:[%s1 + $0x18] sm:$0xff]
      %vm222 = vcmask 261120
      %v224 = vsel %vm222, %v202, 0
      %v227 = vsel %vm222, %v203, 0
      %v230 = vsel %vm222, %v204, 0
      %v233 = vsel %vm222, %v205, 0
      %v236 = vsel %vm222, %v206, 0
      %v239 = vsel %vm222, %v207, 0
      %v242 = vsel %vm222, %v208, 0
      %v245 = vsel %vm222, %v209, 0
      %v248 = vsel %vm222, %v210, 0
      %v251 = vsel %vm222, %v211, 0
      %v254 = vsel %vm222, %v212, 0
      %v257 = vsel %vm222, %v213, 0
      %v260 = vsel %vm222, %v214, 0
      %v263 = vsel %vm222, %v215, 0
      %v266 = vsel %vm222, %v216, 0
      %v269 = vsel %vm222, %v217, 0
      %271 = vmatprep.subr.mxu0 0.0
      %272 = vmatpush1.msra.mxu0 %v218
      %273 = vmatprep.subr.mxu0 0.0
      %274 = vmatpush1.msra.mxu0 %v219
      %275 = vmatprep.subr.mxu0 0.0
      %276 = vmatpush1.msra.mxu0 %v220
      %277 = vmatprep.subr.mxu0 0.0
      %278 = vmatpush1.msra.mxu0 %v221
      %279 = vmatprep.subr.mxu0 0.0
      %280 = vmatpush1.msra.mxu0 0.0
      %281 = vmatprep.subr.mxu0 0.0
      %282 = vmatpush1.msra.mxu0 0.0
      %283 = vmatprep.subr.mxu0 0.0
      %284 = vmatpush1.msra.mxu0 0.0
      %285 = vmatprep.subr.mxu0 0.0
      %286 = vmatpush1.msra.mxu0 0.0
      %287 = vmatprep.subr.mxu0 0.0
      %288 = vmatpush1.msra.mxu0 0.0
      %289 = vmatprep.subr.mxu0 0.0
      %290 = vmatpush1.msra.mxu0 0.0
      %291 = vmatprep.subr.mxu0 0.0
      %292 = vmatpush1.msra.mxu0 0.0
      %293 = vmatprep.subr.mxu0 0.0
      %294 = vmatpush1.msra.mxu0 0.0
      %295 = vmatprep.subr.mxu0 0.0
      %296 = vmatpush1.msra.mxu0 0.0
      %297 = vmatprep.subr.mxu0 0.0
      %298 = vmatpush1.msra.mxu0 0.0
      %299 = vmatprep.subr.mxu0 0.0
      %300 = vmatpush1.msra.mxu0 0.0
      %301 = vmatprep.subr.mxu0 0.0
      %302 = vmatpush1.msra.mxu0 0.0
      %303 = vmatprep.subr.mxu0 0.0
      %304 = vmatpush1.msra.mxu0 0.0
      %305 = vmatprep.subr.mxu0 0.0
      %306 = vmatpush1.msra.mxu0 0.0
      %307 = vmatprep.subr.mxu0 0.0
      %308 = vmatpush1.msra.mxu0 0.0
      %309 = vmatprep.subr.mxu0 0.0
      %310 = vmatpush1.msra.mxu0 0.0
      %311 = vmatprep.subr.mxu0 0.0
      %312 = vmatpush1.msra.mxu0 0.0
      %313 = vmatprep.subr.mxu0 0.0
      %314 = vmatpush1.msra.mxu0 0.0
      %315 = vmatprep.subr.mxu0 0.0
      %316 = vmatpush1.msra.mxu0 0.0
      %317 = vmatprep.subr.mxu0 0.0
      %318 = vmatpush1.msra.mxu0 0.0
      %319 = vmatprep.subr.mxu0 0.0
      %320 = vmatpush1.msra.mxu0 0.0
      %321 = vmatprep.subr.mxu0 0.0
      %322 = vmatpush1.msra.mxu0 0.0
      %323 = vmatprep.subr.mxu0 0.0
      %324 = vmatpush1.msra.mxu0 0.0
      %325 = vmatprep.subr.mxu0 0.0
      %326 = vmatpush1.msra.mxu0 0.0
      %327 = vmatprep.subr.mxu0 0.0
      %328 = vmatpush1.msra.mxu0 0.0
      %329 = vmatprep.subr.mxu0 0.0
      %330 = vmatpush1.msra.mxu0 0.0
      %331 = vmatprep.subr.mxu0 0.0
      %332 = vmatpush1.msra.mxu0 0.0
      %333 = vmatprep.subr.mxu0 0.0
      %334 = vmatpush1.msra.mxu0 0.0
      %335 = vmatprep.mubr.f32.mxu0 0.0
      %336 = vmatmul.mubr.f32.gmra.mrb[0].mxu0 %v224
      %v337 = vpop.f32.mrb[0].mxu0
      %v338 = vadd.f32 0.0, %v337
      %v339 = vpop.f32.mrb[0].mxu0
      %340 = vmatprep.mubr.f32.mxu0 0.0
      %341 = vmatmul.mubr.f32.gmra.mrb[0].mxu0 %v227
      %v342 = vpop.f32.mrb[0].mxu0
      %v343 = vadd.f32 0.0, %v342
      %v344 = vpop.f32.mrb[0].mxu0
      %345 = vmatprep.mubr.f32.mxu0 0.0
      %346 = vmatmul.mubr.f32.gmra.mrb[0].mxu0 %v230
      %v347 = vpop.f32.mrb[0].mxu0
      %v348 = vadd.f32 0.0, %v347
      %v349 = vpop.f32.mrb[0].mxu0
      %350 = vmatprep.mubr.f32.mxu0 0.0
      %351 = vmatmul.mubr.f32.gmra.mrb[0].mxu0 %v233
      %v352 = vpop.f32.mrb[0].mxu0
      %v353 = vadd.f32 0.0, %v352
      %v354 = vpop.f32.mrb[0].mxu0
      %355 = vmatprep.mubr.f32.mxu0 0.0
      %356 = vmatmul.mubr.f32.gmra.mrb[0].mxu0 %v236
      %v357 = vpop.f32.mrb[0].mxu0
      %v358 = vadd.f32 0.0, %v357
      %v359 = vpop.f32.mrb[0].mxu0
      %360 = vmatprep.mubr.f32.mxu0 0.0
      %361 = vmatmul.mubr.f32.gmra.mrb[0].mxu0 %v239
      %v362 = vpop.f32.mrb[0].mxu0
      %v363 = vadd.f32 0.0, %v362
      %v364 = vpop.f32.mrb[0].mxu0
      %365 = vmatprep.mubr.f32.mxu0 0.0
      %366 = vmatmul.mubr.f32.gmra.mrb[0].mxu0 %v242
      %v367 = vpop.f32.mrb[0].mxu0
      %v368 = vadd.f32 0.0, %v367
      %v369 = vpop.f32.mrb[0].mxu0
      %370 = vmatprep.mubr.f32.mxu0 0.0
      %371 = vmatmul.mubr.f32.gmra.mrb[0].mxu0 %v245
      %v372 = vpop.f32.mrb[0].mxu0
      %v373 = vadd.f32 0.0, %v372
      %v374 = vpop.f32.mrb[0].mxu0
      %375 = vmatprep.mubr.f32.mxu0 0.0
      %376 = vmatmul.mubr.f32.gmra.mrb[0].mxu0 %v248
      %v377 = vpop.f32.mrb[0].mxu0
      %v378 = vadd.f32 0.0, %v377
      %v379 = vpop.f32.mrb[0].mxu0
      %380 = vmatprep.mubr.f32.mxu0 0.0
      %381 = vmatmul.mubr.f32.gmra.mrb[0].mxu0 %v251
      %v382 = vpop.f32.mrb[0].mxu0
      %v383 = vadd.f32 0.0, %v382
      %v384 = vpop.f32.mrb[0].mxu0
      %385 = vmatprep.mubr.f32.mxu0 0.0
      %386 = vmatmul.mubr.f32.gmra.mrb[0].mxu0 %v254
      %v387 = vpop.f32.mrb[0].mxu0
      %v388 = vadd.f32 0.0, %v387
      %v389 = vpop.f32.mrb[0].mxu0
      %390 = vmatprep.mubr.f32.mxu0 0.0
      %391 = vmatmul.mubr.f32.gmra.mrb[0].mxu0 %v257
      %v392 = vpop.f32.mrb[0].mxu0
      %v393 = vadd.f32 0.0, %v392
      %v394 = vpop.f32.mrb[0].mxu0
      %395 = vmatprep.mubr.f32.mxu0 0.0
      %396 = vmatmul.mubr.f32.gmra.mrb[0].mxu0 %v260
      %v397 = vpop.f32.mrb[0].mxu0
      %v398 = vadd.f32 0.0, %v397
      %v399 = vpop.f32.mrb[0].mxu0
      %400 = vmatprep.mubr.f32.mxu0 0.0
      %401 = vmatmul.mubr.f32.gmra.mrb[0].mxu0 %v263
      %v402 = vpop.f32.mrb[0].mxu0
      %v403 = vadd.f32 0.0, %v402
      %v404 = vpop.f32.mrb[0].mxu0
      %405 = vmatprep.mubr.f32.mxu0 0.0
      %406 = vmatmul.mubr.f32.gmra.mrb[0].mxu0 %v266
      %v407 = vpop.f32.mrb[0].mxu0
      %v408 = vadd.f32 0.0, %v407
      %v409 = vpop.f32.mrb[0].mxu0
      %410 = vmatprep.mubr.f32.mxu0 0.0
      %411 = vmatmul.mubr.f32.gmra.mrb[0].mxu0 %v269
      %v412 = vpop.f32.mrb[0].mxu0
      %v413 = vadd.f32 0.0, %v412
      %v414 = vpop.f32.mrb[0].mxu0
      %415 = vdwg.mxu0
      %v416 = vmul.f32 %v202, %v202
      %v417 = vmul.f32 %v203, %v203
      %v418 = vmul.f32 %v204, %v204
      %v419 = vmul.f32 %v205, %v205
      %v420 = vmul.f32 %v206, %v206
      %v421 = vmul.f32 %v207, %v207
      %v422 = vmul.f32 %v208, %v208
      %v423 = vmul.f32 %v209, %v209
      %v424 = vmul.f32 %v210, %v210
      %v425 = vmul.f32 %v211, %v211
      %v426 = vmul.f32 %v212, %v212
      %v427 = vmul.f32 %v213, %v213
      %v428 = vmul.f32 %v214, %v214
      %v429 = vmul.f32 %v215, %v215
      %v430 = vmul.f32 %v216, %v216
      %v431 = vmul.f32 %v217, %v217
      %v432 = vld [vmem:[%s2] sm:$0xff]
      %v433 = vld [vmem:[%s2 + $0x8] sm:$0xff]
      %v434 = vld [vmem:[%s2 + $0x10] sm:$0xff]
      %v435 = vld [vmem:[%s2 + $0x18] sm:$0xff]
      %v437 = vsel %vm222, %v416, 0
      %v440 = vsel %vm222, %v417, 0
      %v443 = vsel %vm222, %v418, 0
      %v446 = vsel %vm222, %v419, 0
      %v449 = vsel %vm222, %v420, 0
      %v452 = vsel %vm222, %v421, 0
      %v455 = vsel %vm222, %v422, 0
      %v458 = vsel %vm222, %v423, 0
      %v461 = vsel %vm222, %v424, 0
      %v464 = vsel %vm222, %v425, 0
      %v467 = vsel %vm222, %v426, 0
      %v470 = vsel %vm222, %v427, 0
      %v473 = vsel %vm222, %v428, 0
      %v476 = vsel %vm222, %v429, 0
      %v479 = vsel %vm222, %v430, 0
      %v482 = vsel %vm222, %v431, 0
      %484 = vmatprep.subr.mxu0 0.0
      %485 = vmatpush1.msra.mxu0 %v432
      %486 = vmatprep.subr.mxu0 0.0
      %487 = vmatpush1.msra.mxu0 %v433
      %488 = vmatprep.subr.mxu0 0.0
      %489 = vmatpush1.msra.mxu0 %v434
      %490 = vmatprep.subr.mxu0 0.0
      %491 = vmatpush1.msra.mxu0 %v435
      %492 = vmatprep.subr.mxu0 0.0
      %493 = vmatpush1.msra.mxu0 0.0
      %494 = vmatprep.subr.mxu0 0.0
      %495 = vmatpush1.msra.mxu0 0.0
      %496 = vmatprep.subr.mxu0 0.0
      %497 = vmatpush1.msra.mxu0 0.0
      %498 = vmatprep.subr.mxu0 0.0
      %499 = vmatpush1.msra.mxu0 0.0
      %500 = vmatprep.subr.mxu0 0.0
      %501 = vmatpush1.msra.mxu0 0.0
      %502 = vmatprep.subr.mxu0 0.0
      %503 = vmatpush1.msra.mxu0 0.0
      %504 = vmatprep.subr.mxu0 0.0
      %505 = vmatpush1.msra.mxu0 0.0
      %506 = vmatprep.subr.mxu0 0.0
      %507 = vmatpush1.msra.mxu0 0.0
      %508 = vmatprep.subr.mxu0 0.0
      %509 = vmatpush1.msra.mxu0 0.0
      %510 = vmatprep.subr.mxu0 0.0
      %511 = vmatpush1.msra.mxu0 0.0
      %512 = vmatprep.subr.mxu0 0.0
      %513 = vmatpush1.msra.mxu0 0.0
      %514 = vmatprep.subr.mxu0 0.0
      %515 = vmatpush1.msra.mxu0 0.0
      %516 = vmatprep.subr.mxu0 0.0
      %517 = vmatpush1.msra.mxu0 0.0
      %518 = vmatprep.subr.mxu0 0.0
      %519 = vmatpush1.msra.mxu0 0.0
      %520 = vmatprep.subr.mxu0 0.0
      %521 = vmatpush1.msra.mxu0 0.0
      %522 = vmatprep.subr.mxu0 0.0
      %523 = vmatpush1.msra.mxu0 0.0
      %524 = vmatprep.subr.mxu0 0.0
      %525 = vmatpush1.msra.mxu0 0.0
      %526 = vmatprep.subr.mxu0 0.0
      %527 = vmatpush1.msra.mxu0 0.0
      %528 = vmatprep.subr.mxu0 0.0
      %529 = vmatpush1.msra.mxu0 0.0
      %530 = vmatprep.subr.mxu0 0.0
      %531 = vmatpush1.msra.mxu0 0.0
      %532 = vmatprep.subr.mxu0 0.0
      %533 = vmatpush1.msra.mxu0 0.0
      %534 = vmatprep.subr.mxu0 0.0
      %535 = vmatpush1.msra.mxu0 0.0
      %536 = vmatprep.subr.mxu0 0.0
      %537 = vmatpush1.msra.mxu0 0.0
      %538 = vmatprep.subr.mxu0 0.0
      %539 = vmatpush1.msra.mxu0 0.0
      %540 = vmatprep.subr.mxu0 0.0
      %541 = vmatpush1.msra.mxu0 0.0
      %542 = vmatprep.subr.mxu0 0.0
      %543 = vmatpush1.msra.mxu0 0.0
      %544 = vmatprep.subr.mxu0 0.0
      %545 = vmatpush1.msra.mxu0 0.0
      %546 = vmatprep.subr.mxu0 0.0
      %547 = vmatpush1.msra.mxu0 0.0
      %548 = vmatprep.mubr.f32.mxu0 0.0
      %549 = vmatmul.mubr.f32.gmra.mrb[0].mxu0 %v437
      %v550 = vpop.f32.mrb[0].mxu0
      %v551 = vadd.f32 0.0, %v550
      %v552 = vpop.f32.mrb[0].mxu0
      %553 = vmatprep.mubr.f32.mxu0 0.0
      %554 = vmatmul.mubr.f32.gmra.mrb[0].mxu0 %v440
      %v555 = vpop.f32.mrb[0].mxu0
      %v556 = vadd.f32 0.0, %v555
      %v557 = vpop.f32.mrb[0].mxu0
      %558 = vmatprep.mubr.f32.mxu0 0.0
      %559 = vmatmul.mubr.f32.gmra.mrb[0].mxu0 %v443
      %v560 = vpop.f32.mrb[0].mxu0
      %v561 = vadd.f32 0.0, %v560
      %v562 = vpop.f32.mrb[0].mxu0
      %563 = vmatprep.mubr.f32.mxu0 0.0
      %564 = vmatmul.mubr.f32.gmra.mrb[0].mxu0 %v446
      %v565 = vpop.f32.mrb[0].mxu0
      %v566 = vadd.f32 0.0, %v565
      %v567 = vpop.f32.mrb[0].mxu0
      %568 = vmatprep.mubr.f32.mxu0 0.0
      %569 = vmatmul.mubr.f32.gmra.mrb[0].mxu0 %v449
      %v570 = vpop.f32.mrb[0].mxu0
      %v571 = vadd.f32 0.0, %v570
      %v572 = vpop.f32.mrb[0].mxu0
      %573 = vmatprep.mubr.f32.mxu0 0.0
      %574 = vmatmul.mubr.f32.gmra.mrb[0].mxu0 %v452
      %v575 = vpop.f32.mrb[0].mxu0
      %v576 = vadd.f32 0.0, %v575
      %v577 = vpop.f32.mrb[0].mxu0
      %578 = vmatprep.mubr.f32.mxu0 0.0
      %579 = vmatmul.mubr.f32.gmra.mrb[0].mxu0 %v455
      %v580 = vpop.f32.mrb[0].mxu0
      %v581 = vadd.f32 0.0, %v580
      %v582 = vpop.f32.mrb[0].mxu0
      %583 = vmatprep.mubr.f32.mxu0 0.0
      %584 = vmatmul.mubr.f32.gmra.mrb[0].mxu0 %v458
      %v585 = vpop.f32.mrb[0].mxu0
      %v586 = vadd.f32 0.0, %v585
      %v587 = vpop.f32.mrb[0].mxu0
      %588 = vmatprep.mubr.f32.mxu0 0.0
      %589 = vmatmul.mubr.f32.gmra.mrb[0].mxu0 %v461
      %v590 = vpop.f32.mrb[0].mxu0
      %v591 = vadd.f32 0.0, %v590
      %v592 = vpop.f32.mrb[0].mxu0
      %593 = vmatprep.mubr.f32.mxu0 0.0
      %594 = vmatmul.mubr.f32.gmra.mrb[0].mxu0 %v464
      %v595 = vpop.f32.mrb[0].mxu0
      %v596 = vadd.f32 0.0, %v595
      %v597 = vpop.f32.mrb[0].mxu0
      %598 = vmatprep.mubr.f32.mxu0 0.0
      %599 = vmatmul.mubr.f32.gmra.mrb[0].mxu0 %v467
      %v600 = vpop.f32.mrb[0].mxu0
      %v601 = vadd.f32 0.0, %v600
      %v602 = vpop.f32.mrb[0].mxu0
      %603 = vmatprep.mubr.f32.mxu0 0.0
      %604 = vmatmul.mubr.f32.gmra.mrb[0].mxu0 %v470
      %v605 = vpop.f32.mrb[0].mxu0
      %v606 = vadd.f32 0.0, %v605
      %v607 = vpop.f32.mrb[0].mxu0
      %608 = vmatprep.mubr.f32.mxu0 0.0
      %609 = vmatmul.mubr.f32.gmra.mrb[0].mxu0 %v473
      %v610 = vpop.f32.mrb[0].mxu0
      %v611 = vadd.f32 0.0, %v610
      %v612 = vpop.f32.mrb[0].mxu0
      %613 = vmatprep.mubr.f32.mxu0 0.0
      %614 = vmatmul.mubr.f32.gmra.mrb[0].mxu0 %v476
      %v615 = vpop.f32.mrb[0].mxu0
      %v616 = vadd.f32 0.0, %v615
      %v617 = vpop.f32.mrb[0].mxu0
      %618 = vmatprep.mubr.f32.mxu0 0.0
      %619 = vmatmul.mubr.f32.gmra.mrb[0].mxu0 %v479
      %v620 = vpop.f32.mrb[0].mxu0
      %v621 = vadd.f32 0.0, %v620
      %v622 = vpop.f32.mrb[0].mxu0
      %623 = vmatprep.mubr.f32.mxu0 0.0
      %624 = vmatmul.mubr.f32.gmra.mrb[0].mxu0 %v482
      %v625 = vpop.f32.mrb[0].mxu0
      %v626 = vadd.f32 0.0, %v625
      %v627 = vpop.f32.mrb[0].mxu0
      %628 = vdwg.mxu0
      %v629 = vmul.f32 %v338, %v338
      %v630 = vmul.f32 %v343, %v343
      %v631 = vmul.f32 %v348, %v348
      %v632 = vmul.f32 %v353, %v353
      %v633 = vmul.f32 %v358, %v358
      %v634 = vmul.f32 %v363, %v363
      %v635 = vmul.f32 %v368, %v368
      %v636 = vmul.f32 %v373, %v373
      %v637 = vmul.f32 %v378, %v378
      %v638 = vmul.f32 %v383, %v383
      %v639 = vmul.f32 %v388, %v388
      %v640 = vmul.f32 %v393, %v393
      %v641 = vmul.f32 %v398, %v398
      %v642 = vmul.f32 %v403, %v403
      %v643 = vmul.f32 %v408, %v408
      %v644 = vmul.f32 %v413, %v413
      %vm645 = vcmask 130048
      %v646 = vsel %vm645, %v629, 0.0
      %647 = vadd.xlane.f32.xlu0 %v646
      %v648 = vpop.xlane.xlu0 %647
      %v649 = vsel %vm645, %v630, 0.0
      %650 = vadd.xlane.f32.xlu0 %v649
      %v651 = vpop.xlane.xlu0 %650
      %v652 = vsel %vm645, %v631, 0.0
      %653 = vadd.xlane.f32.xlu0 %v652
      %v654 = vpop.xlane.xlu0 %653
      %v655 = vsel %vm645, %v632, 0.0
      %656 = vadd.xlane.f32.xlu0 %v655
      %v657 = vpop.xlane.xlu0 %656
      %v658 = vsel %vm645, %v633, 0.0
      %659 = vadd.xlane.f32.xlu0 %v658
      %v660 = vpop.xlane.xlu0 %659
      %v661 = vsel %vm645, %v634, 0.0
      %662 = vadd.xlane.f32.xlu0 %v661
      %v663 = vpop.xlane.xlu0 %662
      %v664 = vsel %vm645, %v635, 0.0
      %665 = vadd.xlane.f32.xlu0 %v664
      %v666 = vpop.xlane.xlu0 %665
      %v667 = vsel %vm645, %v636, 0.0
      %668 = vadd.xlane.f32.xlu0 %v667
      %v669 = vpop.xlane.xlu0 %668
      %v670 = vsel %vm645, %v637, 0.0
      %671 = vadd.xlane.f32.xlu0 %v670
      %v672 = vpop.xlane.xlu0 %671
      %v673 = vsel %vm645, %v638, 0.0
      %674 = vadd.xlane.f32.xlu0 %v673
      %v675 = vpop.xlane.xlu0 %674
      %v676 = vsel %vm645, %v639, 0.0
      %677 = vadd.xlane.f32.xlu0 %v676
      %v678 = vpop.xlane.xlu0 %677
      %v679 = vsel %vm645, %v640, 0.0
      %680 = vadd.xlane.f32.xlu0 %v679
      %v681 = vpop.xlane.xlu0 %680
      %v682 = vsel %vm645, %v641, 0.0
      %683 = vadd.xlane.f32.xlu0 %v682
      %v684 = vpop.xlane.xlu0 %683
      %v685 = vsel %vm645, %v642, 0.0
      %686 = vadd.xlane.f32.xlu0 %v685
      %v687 = vpop.xlane.xlu0 %686
      %v688 = vsel %vm645, %v643, 0.0
      %689 = vadd.xlane.f32.xlu0 %v688
      %v690 = vpop.xlane.xlu0 %689
      %v691 = vsel %vm645, %v644, 0.0
      %692 = vadd.xlane.f32.xlu0 %v691
      %v693 = vpop.xlane.xlu0 %692
      %v694 = vmul.f32 %v648, 0.5
      %v695 = vmul.f32 %v651, 0.5
      %v696 = vmul.f32 %v654, 0.5
      %v697 = vmul.f32 %v657, 0.5
      %v698 = vmul.f32 %v660, 0.5
      %v699 = vmul.f32 %v663, 0.5
      %v700 = vmul.f32 %v666, 0.5
      %v701 = vmul.f32 %v669, 0.5
      %v702 = vmul.f32 %v672, 0.5
      %v703 = vmul.f32 %v675, 0.5
      %v704 = vmul.f32 %v678, 0.5
      %v705 = vmul.f32 %v681, 0.5
      %v706 = vmul.f32 %v684, 0.5
      %v707 = vmul.f32 %v687, 0.5
      %v708 = vmul.f32 %v690, 0.5
      %v709 = vmul.f32 %v693, 0.5
      %726 = vrot.lane.b32.xlu0 %v551, 16
      %v727 = vpop.permute.xlu0 %726
      %728 = vrot.lane.b32.xlu0 %v556, 16
      %v729 = vpop.permute.xlu0 %728
      %730 = vrot.lane.b32.xlu0 %v561, 16
      %v731 = vpop.permute.xlu0 %730
      %732 = vrot.lane.b32.xlu0 %v566, 16
      %v733 = vpop.permute.xlu0 %732
      %734 = vrot.lane.b32.xlu0 %v571, 16
      %v735 = vpop.permute.xlu0 %734
      %736 = vrot.lane.b32.xlu0 %v576, 16
      %v737 = vpop.permute.xlu0 %736
      %738 = vrot.lane.b32.xlu0 %v581, 16
      %v739 = vpop.permute.xlu0 %738
      %740 = vrot.lane.b32.xlu0 %v586, 16
      %v741 = vpop.permute.xlu0 %740
      %742 = vrot.lane.b32.xlu0 %v591, 16
      %v743 = vpop.permute.xlu0 %742
      %744 = vrot.lane.b32.xlu0 %v596, 16
      %v745 = vpop.permute.xlu0 %744
      %746 = vrot.lane.b32.xlu0 %v601, 16
      %v747 = vpop.permute.xlu0 %746
      %748 = vrot.lane.b32.xlu0 %v606, 16
      %v749 = vpop.permute.xlu0 %748
      %750 = vrot.lane.b32.xlu0 %v611, 16
      %v751 = vpop.permute.xlu0 %750
      %752 = vrot.lane.b32.xlu0 %v616, 16
      %v753 = vpop.permute.xlu0 %752
      %754 = vrot.lane.b32.xlu0 %v621, 16
      %v755 = vpop.permute.xlu0 %754
      %756 = vrot.lane.b32.xlu0 %v626, 16
      %v757 = vpop.permute.xlu0 %756
      %v774 = vadd.f32 %v338, %v727
      %v775 = vadd.f32 %v343, %v729
      %v776 = vadd.f32 %v348, %v731
      %v777 = vadd.f32 %v353, %v733
      %v778 = vadd.f32 %v358, %v735
      %v779 = vadd.f32 %v363, %v737
      %v780 = vadd.f32 %v368, %v739
      %v781 = vadd.f32 %v373, %v741
      %v782 = vadd.f32 %v378, %v743
      %v783 = vadd.f32 %v383, %v745
      %v784 = vadd.f32 %v388, %v747
      %v785 = vadd.f32 %v393, %v749
      %v786 = vadd.f32 %v398, %v751
      %v787 = vadd.f32 %v403, %v753
      %v788 = vadd.f32 %v408, %v755
      %v789 = vadd.f32 %v413, %v757
      %v790 = vadd.f32 %v774, %v694
      %v791 = vadd.f32 %v775, %v695
      %v792 = vadd.f32 %v776, %v696
      %v793 = vadd.f32 %v777, %v697
      %v794 = vadd.f32 %v778, %v698
      %v795 = vadd.f32 %v779, %v699
      %v796 = vadd.f32 %v780, %v700
      %v797 = vadd.f32 %v781, %v701
      %v798 = vadd.f32 %v782, %v702
      %v799 = vadd.f32 %v783, %v703
      %v800 = vadd.f32 %v784, %v704
      %v801 = vadd.f32 %v785, %v705
      %v802 = vadd.f32 %v786, %v706
      %v803 = vadd.f32 %v787, %v707
      %v804 = vadd.f32 %v788, %v708
      %v805 = vadd.f32 %v789, %v709
      %s806 = sld [smem:[#allocation2]]
      %v807 = vstv %s806
      %v808 = vadd.f32 %v790, %v807
      %v809 = vadd.f32 %v791, %v807
      %v810 = vadd.f32 %v792, %v807
      %v811 = vadd.f32 %v793, %v807
      %v812 = vadd.f32 %v794, %v807
      %v813 = vadd.f32 %v795, %v807
      %v814 = vadd.f32 %v796, %v807
      %v815 = vadd.f32 %v797, %v807
      %v816 = vadd.f32 %v798, %v807
      %v817 = vadd.f32 %v799, %v807
      %v818 = vadd.f32 %v800, %v807
      %v819 = vadd.f32 %v801, %v807
      %v820 = vadd.f32 %v802, %v807
      %v821 = vadd.f32 %v803, %v807
      %v822 = vadd.f32 %v804, %v807
      %v823 = vadd.f32 %v805, %v807
      %840 = vrot.lane.b32.xlu0 %v808, 112
      %v841 = vpop.permute.xlu0 %840
      %842 = vrot.lane.b32.xlu0 %v809, 112
      %v843 = vpop.permute.xlu0 %842
      %844 = vrot.lane.b32.xlu0 %v810, 112
      %v845 = vpop.permute.xlu0 %844
      %846 = vrot.lane.b32.xlu0 %v811, 112
      %v847 = vpop.permute.xlu0 %846
      %848 = vrot.lane.b32.xlu0 %v812, 112
      %v849 = vpop.permute.xlu0 %848
      %850 = vrot.lane.b32.xlu0 %v813, 112
      %v851 = vpop.permute.xlu0 %850
      %852 = vrot.lane.b32.xlu0 %v814, 112
      %v853 = vpop.permute.xlu0 %852
      %854 = vrot.lane.b32.xlu0 %v815, 112
      %v855 = vpop.permute.xlu0 %854
      %856 = vrot.lane.b32.xlu0 %v816, 112
      %v857 = vpop.permute.xlu0 %856
      %858 = vrot.lane.b32.xlu0 %v817, 112
      %v859 = vpop.permute.xlu0 %858
      %860 = vrot.lane.b32.xlu0 %v818, 112
      %v861 = vpop.permute.xlu0 %860
      %862 = vrot.lane.b32.xlu0 %v819, 112
      %v863 = vpop.permute.xlu0 %862
      %864 = vrot.lane.b32.xlu0 %v820, 112
      %v865 = vpop.permute.xlu0 %864
      %866 = vrot.lane.b32.xlu0 %v821, 112
      %v867 = vpop.permute.xlu0 %866
      %868 = vrot.lane.b32.xlu0 %v822, 112
      %v869 = vpop.permute.xlu0 %868
      %870 = vrot.lane.b32.xlu0 %v823, 112
      %v871 = vpop.permute.xlu0 %870
      %vm888 = vcmask 7168
      %889 = vst.msk [vmem:[%s200] sm:$0xff] %vm888, %v841
      %890 = vst.msk [vmem:[%s200 + $0x8] sm:$0xff] %vm888, %v843
      %891 = vst.msk [vmem:[%s200 + $0x10] sm:$0xff] %vm888, %v845
      %892 = vst.msk [vmem:[%s200 + $0x18] sm:$0xff] %vm888, %v847
      %893 = vst.msk [vmem:[%s200 + $0x20] sm:$0xff] %vm888, %v849
      %894 = vst.msk [vmem:[%s200 + $0x28] sm:$0xff] %vm888, %v851
      %895 = vst.msk [vmem:[%s200 + $0x30] sm:$0xff] %vm888, %v853
      %896 = vst.msk [vmem:[%s200 + $0x38] sm:$0xff] %vm888, %v855
      %897 = vst.msk [vmem:[%s200 + $0x40] sm:$0xff] %vm888, %v857
      %898 = vst.msk [vmem:[%s200 + $0x48] sm:$0xff] %vm888, %v859
      %899 = vst.msk [vmem:[%s200 + $0x50] sm:$0xff] %vm888, %v861
      %900 = vst.msk [vmem:[%s200 + $0x58] sm:$0xff] %vm888, %v863
      %901 = vst.msk [vmem:[%s200 + $0x60] sm:$0xff] %vm888, %v865
      %902 = vst.msk [vmem:[%s200 + $0x68] sm:$0xff] %vm888, %v867
      %903 = vst.msk [vmem:[%s200 + $0x70] sm:$0xff] %vm888, %v869
      %904 = vst.msk [vmem:[%s200 + $0x78] sm:$0xff] %vm888, %v871
      %s905 = smul.u32 16, %s16
      %p906 = scmp.lt.s32.totalorder %s905, 63
      %s907 = scalar_select %p906, %s905, 63
      %s908 = smul.addr %s907, 8
      %s909 = scalar_lea.vmem %s4, %s908
      // Predicated region
      $region37: #{tpu_custom_call.1} parent=35 // pred_check
        %p910 = pneg %p123
      $region38: #{tpu_custom_call.1} parent=35 // pred_check_branch
        %912 = sbr.rel (%p910) target = $region40
      $region39: #{tpu_custom_call.1} parent=35 // pred_region
        %s913 = smul.u32 16, %s16
      $region40: #{tpu_custom_call.1} parent=35 // pred_fallthru
        _
    $region36: #{tpu_custom_call.1} parent=5 // pred_fallthru
      _
    %p914 = scmp.le.s32.totalorder 2, %s11
    // Predicated region
    $region41: #{tpu_custom_call.1} parent=5 // pred_check
      %p915 = pneg %p914
    $region42: #{tpu_custom_call.1} parent=5 // pred_check_branch
      %917 = sbr.rel (%p915) target = $region44
    $region43: #{tpu_custom_call.1} parent=5 // pred_region
      %s918 = ssub.s32 %s11, 2
      // Predicated region
      $region45: #{tpu_custom_call.1} parent=43 // pred_check
        %p919 = pneg %p129
      $region46: #{tpu_custom_call.1} parent=43 // pred_check_branch
        %921 = sbr.rel (%p919) target = $region48
      $region47: #{tpu_custom_call.1} parent=43 // pred_region
        %s922 = smul.u32 16, %s17
        %p923 = scmp.lt.s32.totalorder %s922, 63
        %s924 = scalar_select %p923, %s922, 63
        %s925 = smul.addr %s924, 8
        %s926 = scalar_lea.vmem %s4, %s925
      $region48: #{tpu_custom_call.1} parent=43 // pred_fallthru
        _
    $region44: #{tpu_custom_call.1} parent=5 // pred_fallthru
      _
  $region6: #{tpu_custom_call.1} parent=0 // loop_footer
    %s15 = sadd.s32 1, %s11
  $region7: #{tpu_custom_call.1} parent=0 // loop_footer_branch
    %10 = sbr.rel target = $region3
  $region8: #{tpu_custom_call.1} parent=0 // loop_exit
    _

</llo_original>
